<compile_context>
chip_gen: v7x
topology: tpu7x:2x2x1
jax: 0.10.0
libtpu: 0.0.40
codegen_flags: <defaults>
</compile_context>

<pallas_src>
import jax
import jax.numpy as jnp
from jax.experimental import pallas as pl
from jax.experimental.pallas import tpu as pltpu


def _round_up(n, m):
    return (n + m - 1) // m * m


def _make_rnn_kernel(Tc, Bp):
    """Kernel closure over static chunk length Tc and padded batch Bp."""

    def kernel(x_ref, w_ih_ref, w_hh_ref, w_fc_ref, b_fc_ref,
               out_ref, pre_ref, h_ref):
        # Zero the carried hidden state on the first time-chunk only.
        @pl.when(pl.program_id(0) == 0)
        def _():
            h_ref[...] = jnp.zeros_like(h_ref)

        # ---- Phase 1 (throughput): input projection for the whole chunk, one MXU
        # matmul (operands may be bf16, accumulate f32).  The RNN bias is folded in
        # via a ones-column of x, so no extra full-slab VPU pass.
        pre_ref[...] = jnp.dot(x_ref[...], w_ih_ref[...],
                               preferred_element_type=jnp.float32)

        w_hh = w_hh_ref[...]      # (Hp, Hp)  loop-invariant, f32
        w_fc = w_fc_ref[...]      # (Hp, Op)  loop-invariant, f32
        b_fc = b_fc_ref[...]      # (1,  Op)
        # TODO(synk): a weight-stationary w_hh via pltpu.matmul_push_rhs /
        # matmul_acc_lhs / matmul_pop would avoid restreaming the RHS each step;
        # kept on jnp.dot for lowering robustness.

        # ---- Phase 2 + 3 (latency): serial recurrence with the FC head interleaved
        # into the MXU/EUP slack of the tanh dependency chain.  Tc is small by
        # construction, so full unroll keeps LLO visibility without code blowup.
        def step(t, h_prev):
            row = pl.multiple_of(t * Bp, Bp)                 # sublane-aligned slice
            pre = pre_ref[pl.ds(row, Bp), :]
            h_new = jnp.tanh(pre + jnp.dot(h_prev, w_hh,
                                           preferred_element_type=jnp.float32))
            y = jnp.dot(h_new, w_fc, preferred_element_type=jnp.float32) + b_fc
            out_ref[pl.ds(row, Bp), :] = y.astype(out_ref.dtype)
            return h_new

        h_ref[...] = jax.lax.fori_loop(0, Tc, step, h_ref[...], unroll=True)

    return kernel


def rnn_forward(x, params, *, t_chunk=4, use_bf16_input_proj=True):
    """x: (B, T, I) float32 -> (B, T, O) float32 (matches the PyTorch forward)."""
    w_ih, w_hh, b_ih, b_hh, w_fc, b_fc = (
        params["w_ih"], params["w_hh"], params["b_ih"],
        params["b_hh"], params["w_fc"], params["b_fc"])
    B, T, I = x.shape
    H = w_ih.shape[0]
    O = w_fc.shape[0]

    # TPU-friendly padding: batch -> sublane multiple (8), features -> lane
    # multiple (128).  +1 input column carries the folded RNN bias.
    Bp = _round_up(max(B, 8), 8)
    Ip = _round_up(I + 1, 128)
    Hp = _round_up(H, 128)
    Op = _round_up(O, 128)
    Tc = max(1, min(t_chunk, T))
    Tp = _round_up(T, Tc)
    n_chunks = Tp // Tc

    in_dtype = jnp.bfloat16 if use_bf16_input_proj else jnp.float32

    # ---- Layout plumbing (time-major, zero-padded, flattened 2-D).
    # For large T*B this transpose/pad should be folded into BlockSpec index_maps;
    # at these shapes it is noise and kept for clarity.
    x_tm = jnp.transpose(x, (1, 0, 2))                                    # (T, B, I)
    x_pad = jnp.zeros((Tp, Bp, Ip), in_dtype)
    x_pad = x_pad.at[:T, :B, :I].set(x_tm.astype(in_dtype))
    x_pad = x_pad.at[:T, :B, I].set(jnp.asarray(1.0, in_dtype))           # bias column
    x_2d = x_pad.reshape(Tp * Bp, Ip)                                     # (Tp*Bp, Ip)

    w_ih_t = jnp.zeros((Ip, Hp), jnp.float32).at[:I, :H].set(w_ih.T)
    w_ih_t = w_ih_t.at[I, :H].set(b_ih + b_hh)                            # folded bias row
    w_ih_t = w_ih_t.astype(in_dtype)                                      # (Ip, Hp)
    w_hh_t = jnp.zeros((Hp, Hp), jnp.float32).at[:H, :H].set(w_hh.T)      # (Hp, Hp)
    w_fc_t = jnp.zeros((Hp, Op), jnp.float32).at[:H, :O].set(w_fc.T)      # (Hp, Op)
    b_fc_p = jnp.zeros((1, Op), jnp.float32).at[0, :O].set(b_fc)          # (1, Op)

    rows = Tc * Bp
    in_isz = jnp.dtype(in_dtype).itemsize
    block_bytes = (
        2 * rows * Ip * in_isz                                      # x chunk (2 bufs)
        + 2 * rows * Op * 4                                         # out chunk (2 bufs)
        + 2 * (Ip * Hp * in_isz + Hp * Hp * 4 + Hp * Op * 4 + Op * 4)   # weights
        + rows * Hp * 4 + Bp * Hp * 4)                              # scratch slabs
    vmem_limit = int(min(max(4 * block_bytes, 16 << 20), 64 << 20))

    out_2d = pl.pallas_call(
        _make_rnn_kernel(Tc, Bp),
        out_shape=jax.ShapeDtypeStruct((Tp * Bp, Op), jnp.float32),
        grid_spec=pltpu.PrefetchScalarGridSpec(
            num_scalar_prefetch=0,
            grid=(n_chunks,),
            in_specs=[
                pl.BlockSpec((rows, Ip), lambda t: (t, 0)),   # x chunk   (streamed)
                pl.BlockSpec((Ip, Hp), lambda t: (0, 0)),     # w_ih      (resident)
                pl.BlockSpec((Hp, Hp), lambda t: (0, 0)),     # w_hh      (resident)
                pl.BlockSpec((Hp, Op), lambda t: (0, 0)),     # w_fc      (resident)
                pl.BlockSpec((1, Op), lambda t: (0, 0)),      # b_fc      (resident)
            ],
            out_specs=pl.BlockSpec((rows, Op), lambda t: (t, 0)),
            scratch_shapes=[
                pltpu.VMEM((rows, Hp), jnp.float32),          # pre-activation slab
                pltpu.VMEM((Bp, Hp), jnp.float32),            # carried hidden state
            ]),
        compiler_params=pltpu.CompilerParams(
            dimension_semantics=("arbitrary",),               # serial carry over chunks
            vmem_limit_bytes=vmem_limit),
    )(x_2d, w_ih_t, w_hh_t, w_fc_t, b_fc_p)

    out_tm = out_2d.reshape(Tp, Bp, Op)[:T, :B, :O]                       # (T, B, O)
    out = jnp.transpose(out_tm, (1, 0, 2))                                # (B, T, O)
    # PyTorch's out.contiguous().view(-1, T, hidden) is a shape no-op here.
    return out


def _reference_forward(x, params):
    """Pure-JAX reference of the PyTorch forward for verification."""
    w_ih, w_hh, b_ih, b_hh, w_fc, b_fc = (
        params["w_ih"], params["w_hh"], params["b_ih"],
        params["b_hh"], params["w_fc"], params["b_fc"])
    B = x.shape[0]
    H = w_ih.shape[0]

    def step(h, x_t):
        h_new = jnp.tanh(x_t @ w_ih.T + b_ih + h @ w_hh.T + b_hh)
        return h_new, h_new

    h0 = jnp.zeros((B, H), jnp.float32)
    _, hs = jax.lax.scan(step, h0, jnp.transpose(x, (1, 0, 2)))   # (T, B, H)
    out = jnp.transpose(hs, (1, 0, 2))                            # (B, T, H)
    return out @ w_fc.T + b_fc


if __name__ == "__main__":
    # Small shapes implied by the module: batch=2, seq=8, input=16, hidden=32, output=8.
    B, T, I, H, O = 2, 8, 16, 32, 8

    key = jax.random.PRNGKey(0)
    ks = jax.random.split(key, 7)
    scale = 1.0 / jnp.sqrt(H)
    params = {
        "w_ih": jax.random.uniform(ks[0], (H, I), jnp.float32, -scale, scale),
        "w_hh": jax.random.uniform(ks[1], (H, H), jnp.float32, -scale, scale),
        "b_ih": jax.random.uniform(ks[2], (H,), jnp.float32, -scale, scale),
        "b_hh": jax.random.uniform(ks[3], (H,), jnp.float32, -scale, scale),
        "w_fc": jax.random.uniform(ks[4], (O, H), jnp.float32, -scale, scale),
        "b_fc": jax.random.uniform(ks[5], (O,), jnp.float32, -scale, scale),
    }
    x = jax.random.normal(ks[6], (B, T, I), jnp.float32)

    ref = _reference_forward(x, params)

    # Full-f32 path: tracks the reference tightly.
    out_f32 = rnn_forward(x, params, use_bf16_input_proj=False)
    jax.block_until_ready(out_f32)
    assert out_f32.shape == (B, T, O), out_f32.shape
    assert jnp.allclose(out_f32, ref, atol=5e-3, rtol=1e-3), \
        float(jnp.max(jnp.abs(out_f32 - ref)))

    # Default perf path: bf16 input projection on the MXU (looser tolerance).
    out = rnn_forward(x, params)
    jax.block_until_ready(out)
    assert out.shape == (B, T, O), out.shape
    assert jnp.allclose(out, ref, atol=5e-2, rtol=5e-2), \
        float(jnp.max(jnp.abs(out - ref)))

    print("KERNEL_OK")
</pallas_src>

<mosaic_0001>
module attributes {stable_mosaic.version = 11 : i64} {
  func.func @kernel(%arg0: i32, %arg1: memref<32x128xf32, #tpu.memory_space<vmem>>, %arg2: memref<128x128xf32, #tpu.memory_space<vmem>>, %arg3: memref<128x128xf32, #tpu.memory_space<vmem>>, %arg4: memref<128x128xf32, #tpu.memory_space<vmem>>, %arg5: memref<1x128xf32, #tpu.memory_space<vmem>>, %arg6: memref<32x128xf32, #tpu.memory_space<vmem>>, %arg7: memref<32x128xf32, #tpu.memory_space<vmem>>, %arg8: memref<8x128xf32, #tpu.memory_space<vmem>>) attributes {dimension_semantics = [#tpu.dimension_semantics<arbitrary>], iteration_bounds = array<i64: 2>, scalar_prefetch = 0 : i64, scratch_operands = 2 : i64, tpu.core_type = #tpu.core_type<tc>, window_params = [{transform_indices = @transform_0, window_bounds = array<i64: 32, 128>}, {pipeline_mode = #tpu.pipeline_mode<synchronous>, transform_indices = @transform_1, window_bounds = array<i64: 128, 128>}, {pipeline_mode = #tpu.pipeline_mode<synchronous>, transform_indices = @transform_2, window_bounds = array<i64: 128, 128>}, {pipeline_mode = #tpu.pipeline_mode<synchronous>, transform_indices = @transform_3, window_bounds = array<i64: 128, 128>}, {pipeline_mode = #tpu.pipeline_mode<synchronous>, transform_indices = @transform_4, window_bounds = array<i64: 1, 128>}, {transform_indices = @transform_5, window_bounds = array<i64: 32, 128>}]} {
    %c0_i32 = arith.constant 0 : i32
    %0 = arith.cmpi eq, %arg0, %c0_i32 : i32
    %1 = arith.extui %0 : i1 to i32
    %c0_i32_0 = arith.constant 0 : i32
    %2 = arith.cmpi ne, %1, %c0_i32_0 : i32
    scf.if %2 {
      %cst_36 = arith.constant 0.000000e+00 : f32
      %60 = vector.broadcast %cst_36 : f32 to vector<8x128xf32>
      %c0_37 = arith.constant 0 : index
      %c0_38 = arith.constant 0 : index
      %61 = vector.load %arg8[%c0_37, %c0_38] : memref<8x128xf32, #tpu.memory_space<vmem>>, vector<8x128xf32>
      tpu.vector_store %arg8[%c0_37, %c0_38], %60 {strides = array<i32>} : memref<8x128xf32, #tpu.memory_space<vmem>>, vector<8x128xf32>,
    } else {
    }
    %c0 = arith.constant 0 : index
    %c0_1 = arith.constant 0 : index
    %3 = vector.load %arg1[%c0, %c0_1] : memref<32x128xf32, #tpu.memory_space<vmem>>, vector<32x128xf32>
    %c0_2 = arith.constant 0 : index
    %c0_3 = arith.constant 0 : index
    %4 = vector.load %arg2[%c0_2, %c0_3] : memref<128x128xf32, #tpu.memory_space<vmem>>, vector<128x128xf32>
    %cst = arith.constant dense<0.000000e+00> : vector<32x128xf32>
    %5 = tpu.matmul %3, %4, %cst {dimension_numbers = #tpu.dot_dimension_numbers<[1], [0], [0], [1], [0, 0, 1, 1], [], []>} : vector<32x128xf32>, vector<128x128xf32>, vector<32x128xf32> -> vector<32x128xf32>
    %c0_4 = arith.constant 0 : index
    %c0_5 = arith.constant 0 : index
    %6 = vector.load %arg7[%c0_4, %c0_5] : memref<32x128xf32, #tpu.memory_space<vmem>>, vector<32x128xf32>
    tpu.vector_store %arg7[%c0_4, %c0_5], %5 {strides = array<i32>} : memref<32x128xf32, #tpu.memory_space<vmem>>, vector<32x128xf32>,
    %c0_6 = arith.constant 0 : index
    %c0_7 = arith.constant 0 : index
    %7 = vector.load %arg3[%c0_6, %c0_7] : memref<128x128xf32, #tpu.memory_space<vmem>>, vector<128x128xf32>
    %c0_8 = arith.constant 0 : index
    %c0_9 = arith.constant 0 : index
    %8 = vector.load %arg4[%c0_8, %c0_9] : memref<128x128xf32, #tpu.memory_space<vmem>>, vector<128x128xf32>
    %c0_10 = arith.constant 0 : index
    %c0_11 = arith.constant 0 : index
    %9 = vector.load %arg5[%c0_10, %c0_11] : memref<1x128xf32, #tpu.memory_space<vmem>>, vector<1x128xf32>
    %c0_12 = arith.constant 0 : index
    %c0_13 = arith.constant 0 : index
    %10 = vector.load %arg8[%c0_12, %c0_13] : memref<8x128xf32, #tpu.memory_space<vmem>>, vector<8x128xf32>
    %c0_i32_14 = arith.constant 0 : i32
    %c8_i32 = arith.constant 8 : i32
    %11 = arith.muli %c0_i32_14, %c8_i32 : i32
    %12 = tpu.assume_multiple %11, 8 : i32
    %13 = arith.index_cast %12 : i32 to index
    %c0_15 = arith.constant 0 : index
    %14 = vector.load %arg7[%13, %c0_15] : memref<32x128xf32, #tpu.memory_space<vmem>>, vector<8x128xf32>
    %cst_16 = arith.constant dense<0.000000e+00> : vector<8x128xf32>
    %15 = tpu.matmul %10, %7, %cst_16 {dimension_numbers = #tpu.dot_dimension_numbers<[1], [0], [0], [1], [0, 0, 1, 1], [], []>} : vector<8x128xf32>, vector<128x128xf32>, vector<8x128xf32> -> vector<8x128xf32>
    %16 = arith.addf %14, %15 : vector<8x128xf32>
    %17 = math.tanh %16 : vector<8x128xf32>
    %cst_17 = arith.constant dense<0.000000e+00> : vector<8x128xf32>
    %18 = tpu.matmul %17, %8, %cst_17 {dimension_numbers = #tpu.dot_dimension_numbers<[1], [0], [0], [1], [0, 0, 1, 1], [], []>} : vector<8x128xf32>, vector<128x128xf32>, vector<8x128xf32> -> vector<8x128xf32>
    %19 = vector.broadcast %9 : vector<1x128xf32> to vector<8x128xf32>
    %20 = arith.addf %18, %19 : vector<8x128xf32>
    %21 = arith.index_cast %12 : i32 to index
    %c0_18 = arith.constant 0 : index
    %22 = vector.load %arg6[%21, %c0_18] : memref<32x128xf32, #tpu.memory_space<vmem>>, vector<8x128xf32>
    tpu.vector_store %arg6[%21, %c0_18], %20 {strides = array<i32>} : memref<32x128xf32, #tpu.memory_space<vmem>>, vector<8x128xf32>,
    %c1_i32 = arith.constant 1 : i32
    %c8_i32_19 = arith.constant 8 : i32
    %23 = arith.muli %c1_i32, %c8_i32_19 : i32
    %24 = tpu.assume_multiple %23, 8 : i32
    %25 = arith.index_cast %24 : i32 to index
    %c0_20 = arith.constant 0 : index
    %26 = vector.load %arg7[%25, %c0_20] : memref<32x128xf32, #tpu.memory_space<vmem>>, vector<8x128xf32>
    %cst_21 = arith.constant dense<0.000000e+00> : vector<8x128xf32>
    %27 = tpu.matmul %17, %7, %cst_21 {dimension_numbers = #tpu.dot_dimension_numbers<[1], [0], [0], [1], [0, 0, 1, 1], [], []>} : vector<8x128xf32>, vector<128x128xf32>, vector<8x128xf32> -> vector<8x128xf32>
    %28 = arith.addf %26, %27 : vector<8x128xf32>
    %29 = math.tanh %28 : vector<8x128xf32>
    %cst_22 = arith.constant dense<0.000000e+00> : vector<8x128xf32>
    %30 = tpu.matmul %29, %8, %cst_22 {dimension_numbers = #tpu.dot_dimension_numbers<[1], [0], [0], [1], [0, 0, 1, 1], [], []>} : vector<8x128xf32>, vector<128x128xf32>, vector<8x128xf32> -> vector<8x128xf32>
    %31 = vector.broadcast %9 : vector<1x128xf32> to vector<8x128xf32>
    %32 = arith.addf %30, %31 : vector<8x128xf32>
    %33 = arith.index_cast %24 : i32 to index
    %c0_23 = arith.constant 0 : index
    %34 = vector.load %arg6[%33, %c0_23] : memref<32x128xf32, #tpu.memory_space<vmem>>, vector<8x128xf32>
    tpu.vector_store %arg6[%33, %c0_23], %32 {strides = array<i32>} : memref<32x128xf32, #tpu.memory_space<vmem>>, vector<8x128xf32>,
    %c2_i32 = arith.constant 2 : i32
    %c8_i32_24 = arith.constant 8 : i32
    %35 = arith.muli %c2_i32, %c8_i32_24 : i32
    %36 = tpu.assume_multiple %35, 8 : i32
    %37 = arith.index_cast %36 : i32 to index
    %c0_25 = arith.constant 0 : index
    %38 = vector.load %arg7[%37, %c0_25] : memref<32x128xf32, #tpu.memory_space<vmem>>, vector<8x128xf32>
    %cst_26 = arith.constant dense<0.000000e+00> : vector<8x128xf32>
    %39 = tpu.matmul %29, %7, %cst_26 {dimension_numbers = #tpu.dot_dimension_numbers<[1], [0], [0], [1], [0, 0, 1, 1], [], []>} : vector<8x128xf32>, vector<128x128xf32>, vector<8x128xf32> -> vector<8x128xf32>
    %40 = arith.addf %38, %39 : vector<8x128xf32>
    %41 = math.tanh %40 : vector<8x128xf32>
    %cst_27 = arith.constant dense<0.000000e+00> : vector<8x128xf32>
    %42 = tpu.matmul %41, %8, %cst_27 {dimension_numbers = #tpu.dot_dimension_numbers<[1], [0], [0], [1], [0, 0, 1, 1], [], []>} : vector<8x128xf32>, vector<128x128xf32>, vector<8x128xf32> -> vector<8x128xf32>
    %43 = vector.broadcast %9 : vector<1x128xf32> to vector<8x128xf32>
    %44 = arith.addf %42, %43 : vector<8x128xf32>
    %45 = arith.index_cast %36 : i32 to index
    %c0_28 = arith.constant 0 : index
    %46 = vector.load %arg6[%45, %c0_28] : memref<32x128xf32, #tpu.memory_space<vmem>>, vector<8x128xf32>
    tpu.vector_store %arg6[%45, %c0_28], %44 {strides = array<i32>} : memref<32x128xf32, #tpu.memory_space<vmem>>, vector<8x128xf32>,
    %c3_i32 = arith.constant 3 : i32
    %c8_i32_29 = arith.constant 8 : i32
    %47 = arith.muli %c3_i32, %c8_i32_29 : i32
    %48 = tpu.assume_multiple %47, 8 : i32
    %49 = arith.index_cast %48 : i32 to index
    %c0_30 = arith.constant 0 : index
    %50 = vector.load %arg7[%49, %c0_30] : memref<32x128xf32, #tpu.memory_space<vmem>>, vector<8x128xf32>
    %cst_31 = arith.constant dense<0.000000e+00> : vector<8x128xf32>
    %51 = tpu.matmul %41, %7, %cst_31 {dimension_numbers = #tpu.dot_dimension_numbers<[1], [0], [0], [1], [0, 0, 1, 1], [], []>} : vector<8x128xf32>, vector<128x128xf32>, vector<8x128xf32> -> vector<8x128xf32>
    %52 = arith.addf %50, %51 : vector<8x128xf32>
    %53 = math.tanh %52 : vector<8x128xf32>
    %cst_32 = arith.constant dense<0.000000e+00> : vector<8x128xf32>
    %54 = tpu.matmul %53, %8, %cst_32 {dimension_numbers = #tpu.dot_dimension_numbers<[1], [0], [0], [1], [0, 0, 1, 1], [], []>} : vector<8x128xf32>, vector<128x128xf32>, vector<8x128xf32> -> vector<8x128xf32>
    %55 = vector.broadcast %9 : vector<1x128xf32> to vector<8x128xf32>
    %56 = arith.addf %54, %55 : vector<8x128xf32>
    %57 = arith.index_cast %48 : i32 to index
    %c0_33 = arith.constant 0 : index
    %58 = vector.load %arg6[%57, %c0_33] : memref<32x128xf32, #tpu.memory_space<vmem>>, vector<8x128xf32>
    tpu.vector_store %arg6[%57, %c0_33], %56 {strides = array<i32>} : memref<32x128xf32, #tpu.memory_space<vmem>>, vector<8x128xf32>,
    %c4_i32 = arith.constant 4 : i32
    %c0_34 = arith.constant 0 : index
    %c0_35 = arith.constant 0 : index
    %59 = vector.load %arg8[%c0_34, %c0_35] : memref<8x128xf32, #tpu.memory_space<vmem>>, vector<8x128xf32>
    tpu.vector_store %arg8[%c0_34, %c0_35], %53 {strides = array<i32>} : memref<8x128xf32, #tpu.memory_space<vmem>>, vector<8x128xf32>,
    return
  }
  func.func @transform_0(%arg0: i32) -> (i32, i32) {
    %c0_i32 = arith.constant 0 : i32
    %c0_i32_0 = arith.constant 0 : i32
    return %arg0, %c0_i32 : i32, i32
  }
  func.func @transform_1(%arg0: i32) -> (i32, i32) {
    %c0_i32 = arith.constant 0 : i32
    %c0_i32_0 = arith.constant 0 : i32
    %c0_i32_1 = arith.constant 0 : i32
    return %c0_i32, %c0_i32_0 : i32, i32
  }
  func.func @transform_2(%arg0: i32) -> (i32, i32) {
    %c0_i32 = arith.constant 0 : i32
    %c0_i32_0 = arith.constant 0 : i32
    %c0_i32_1 = arith.constant 0 : i32
    return %c0_i32, %c0_i32_0 : i32, i32
  }
  func.func @transform_3(%arg0: i32) -> (i32, i32) {
    %c0_i32 = arith.constant 0 : i32
    %c0_i32_0 = arith.constant 0 : i32
    %c0_i32_1 = arith.constant 0 : i32
    return %c0_i32, %c0_i32_0 : i32, i32
  }
  func.func @transform_4(%arg0: i32) -> (i32, i32) {
    %c0_i32 = arith.constant 0 : i32
    %c0_i32_0 = arith.constant 0 : i32
    %c0_i32_1 = arith.constant 0 : i32
    return %c0_i32, %c0_i32_0 : i32, i32
  }
  func.func @transform_5(%arg0: i32) -> (i32, i32) {
    %c0_i32 = arith.constant 0 : i32
    %c0_i32_0 = arith.constant 0 : i32
    return %arg0, %c0_i32 : i32, i32
  }
}

</mosaic_0001>

<llo_original>
// kernel: tpu_custom_call.1
$region0: #{tpu_custom_call.1}
  #allocation0 [shape = 'u32[]', space=smem, size = 0x4, offset = 0x4, fixed_abs, tag = 'smem constant byte address 0x4 - core index']
  #allocation1 [shape = 'u32[144,128]{1,0:T(1,128)}', space=vmem, size = 0x12000, scoped, tag = 'internal scratch']
  #allocation2 [shape = 'f32[32,128]{1,0:T(8,128)}', space=vmem, size = 0x4000, scoped, tag = 'scratch operand']
  #allocation3 [shape = 'f32[8,128]{1,0:T(8,128)}', space=vmem, size = 0x1000, scoped, tag = 'scratch operand']
  %s0 = inlined_call_operand.hbm [shape: f32[64,128], index: 0, kind: input, shape index: {}]
  %s1 = inlined_call_operand.hbm [shape: f32[128,128], index: 1, kind: input, shape index: {}]
  %s2 = inlined_call_operand.hbm [shape: f32[128,128], index: 2, kind: input, shape index: {}]
  %s3 = inlined_call_operand.hbm [shape: f32[128,128], index: 3, kind: input, shape index: {}]
  %s4 = inlined_call_operand.vmem [shape: f32[1,128], index: 4, kind: input, shape index: {}]
  %s5 = inlined_call_operand.hbm [shape: f32[64,128], index: 5, kind: output, shape index: {}]
  %s6 = sld [smem:[#allocation0]]
  $region73: #{tpu_custom_call.1} parent=0
    _
  %s8 = ssub.s32 1, %s6
  %s9 = scalar_select 0, %s8, %s6
  $region1: #{tpu_custom_call.1} parent=0
    #allocation4 [shape = 'u8[32768]{0}', space=vmem, size = 0x8000, scoped, tag = 'input window, operand 0']
    #allocation5 [shape = 's32[2]{0}', space=sflag, size = 0x8, scoped, tag = 'scoped memory for tpu_custom_call.1']
    #allocation6 [shape = 's32[2]{0}', space=sflag, size = 0x8, scoped, tag = 'scoped memory for tpu_custom_call.1']
    #allocation7 [shape = 'u8[65536]{0}', space=vmem, size = 0x10000, scoped, tag = 'input window, operand 1, single buffered']
    #allocation8 [shape = 's32[1]{0}', space=sflag, size = 0x4, scoped, tag = 'scoped memory for tpu_custom_call.1']
    #allocation9 [shape = 'u8[65536]{0}', space=vmem, size = 0x10000, scoped, tag = 'input window, operand 2, single buffered']
    #allocation10 [shape = 'u8[65536]{0}', space=vmem, size = 0x10000, scoped, tag = 'input window, operand 3, single buffered']
    #allocation11 [shape = 's32[1]{0}', space=sflag, size = 0x4, scoped, tag = 'scoped memory for tpu_custom_call.1']
    #allocation12 [shape = 'u8[32768]{0}', space=vmem, size = 0x8000, scoped, tag = 'output window, operand 0']
    %10 = vsyncpa [#allocation5], 0
    %s11 = scalar_lea.sflag [#allocation5], 1
    %12 = vsyncpa %s11, 0
    %13 = vsyncpa [#allocation8], 0
    %14 = vsyncpa [#allocation11], 0
    %15 = vsyncpa [#allocation6], 0
    %s16 = scalar_lea.sflag [#allocation6], 1
    %17 = vsyncpa %s16, 0
    loop: start=0, step=1, limit=4
    $region2: #{tpu_custom_call.1} parent=1 // loop_pre_header
      _
    $region3: #{tpu_custom_call.1} parent=1 // loop_header
      %s19 = sphi 0, %s23
      %p20 = scmp.ge.s32.totalorder %s19, 4
      %s29 = sphi 0, %s31
      %s32 = sphi 0, %s29
      %s33 = sphi 0, %s32
      %s49 = sphi 0, %s33
      %s53 = sphi 0, %s53
      %s55 = sphi 0, %s53
      %s56 = sphi 0, %s55
      %s70 = sphi 0, %s56
      %s74 = sphi 0, %s74
      %s76 = sphi 0, %s74
      %s77 = sphi 0, %s76
      %s91 = sphi 0, %s77
      %s95 = sphi 0, %s95
      %s97 = sphi 0, %s95
      %s98 = sphi 0, %s97
      %s112 = sphi 0, %s98
      %s116 = sphi 0, %s116
      %s118 = sphi 0, %s116
      %s119 = sphi 0, %s118
      %s133 = sphi 0, %s119
      %s139 = sphi 0, %s141
      %s142 = sphi 0, %s139
      %s143 = sphi 0, %s142
      %s159 = sphi 0, %s143
    $region4: #{tpu_custom_call.1} parent=1 // loop_header_branch
      %22 = sbr.rel (%p20) target = $region8
    $region5: #{tpu_custom_call.1} parent=1 // loop_body
      %s24 = ssub.s32 %s19, 1
      %s25 = ssub.s32 %s19, 2
      %s26 = sadd.s32 %s19, 1
      %s27 = ssub.s32 %s19, %s26
      %p28 = scmp.eq.s32.totalorder %s27, 0
      %s30 = sadd.s32 %s29, 1
      %s31 = scalar_select %p28, %s29, %s30
      %p34 = pneg %p28
      %p35 = scmp.eq.s32.totalorder %s19, 1
      %p36 = por %p34, %p35
      %p37 = scmp.ne.s32.totalorder %s29, %s32
      %p38 = scmp.eq.s32.totalorder %s19, 0
      %p39 = por %p37, %p38
      %p40 = scmp.ne.s32.totalorder %s29, %s32
      %p41 = scmp.eq.s32.totalorder %s24, 1
      %p42 = por %p40, %p41
      %p43 = scmp.ne.s32.totalorder %s32, %s33
      %p44 = scmp.eq.s32.totalorder %s24, 0
      %p45 = por %p43, %p44
      %p46 = scmp.ne.s32.totalorder %s32, %s33
      %p47 = scmp.eq.s32.totalorder %s25, 1
      %p48 = por %p46, %p47
      %p50 = scmp.ne.s32.totalorder %s33, %s49
      %p51 = scmp.eq.s32.totalorder %s25, 0
      %p52 = por %p50, %p51
      %s54 = sadd.s32 %s53, 1
      %p57 = scmp.eq.s32.totalorder %s19, 1
      %p58 = scmp.ne.s32.totalorder %s53, %s55
      %p59 = scmp.eq.s32.totalorder %s19, 0
      %p60 = por %p58, %p59
      %p61 = scmp.ne.s32.totalorder %s53, %s55
      %p62 = scmp.eq.s32.totalorder %s24, 1
      %p63 = por %p61, %p62
      %p64 = scmp.ne.s32.totalorder %s55, %s56
      %p65 = scmp.eq.s32.totalorder %s24, 0
      %p66 = por %p64, %p65
      %p67 = scmp.ne.s32.totalorder %s55, %s56
      %p68 = scmp.eq.s32.totalorder %s25, 1
      %p69 = por %p67, %p68
      %p71 = scmp.ne.s32.totalorder %s56, %s70
      %p72 = scmp.eq.s32.totalorder %s25, 0
      %p73 = por %p71, %p72
      %s75 = sadd.s32 %s74, 1
      %p78 = scmp.eq.s32.totalorder %s19, 1
      %p79 = scmp.ne.s32.totalorder %s74, %s76
      %p80 = scmp.eq.s32.totalorder %s19, 0
      %p81 = por %p79, %p80
      %p82 = scmp.ne.s32.totalorder %s74, %s76
      %p83 = scmp.eq.s32.totalorder %s24, 1
      %p84 = por %p82, %p83
      %p85 = scmp.ne.s32.totalorder %s76, %s77
      %p86 = scmp.eq.s32.totalorder %s24, 0
      %p87 = por %p85, %p86
      %p88 = scmp.ne.s32.totalorder %s76, %s77
      %p89 = scmp.eq.s32.totalorder %s25, 1
      %p90 = por %p88, %p89
      %p92 = scmp.ne.s32.totalorder %s77, %s91
      %p93 = scmp.eq.s32.totalorder %s25, 0
      %p94 = por %p92, %p93
      %s96 = sadd.s32 %s95, 1
      %p99 = scmp.eq.s32.totalorder %s19, 1
      %p100 = scmp.ne.s32.totalorder %s95, %s97
      %p101 = scmp.eq.s32.totalorder %s19, 0
      %p102 = por %p100, %p101
      %p103 = scmp.ne.s32.totalorder %s95, %s97
      %p104 = scmp.eq.s32.totalorder %s24, 1
      %p105 = por %p103, %p104
      %p106 = scmp.ne.s32.totalorder %s97, %s98
      %p107 = scmp.eq.s32.totalorder %s24, 0
      %p108 = por %p106, %p107
      %p109 = scmp.ne.s32.totalorder %s97, %s98
      %p110 = scmp.eq.s32.totalorder %s25, 1
      %p111 = por %p109, %p110
      %p113 = scmp.ne.s32.totalorder %s98, %s112
      %p114 = scmp.eq.s32.totalorder %s25, 0
      %p115 = por %p113, %p114
      %s117 = sadd.s32 %s116, 1
      %p120 = scmp.eq.s32.totalorder %s19, 1
      %p121 = scmp.ne.s32.totalorder %s116, %s118
      %p122 = scmp.eq.s32.totalorder %s19, 0
      %p123 = por %p121, %p122
      %p124 = scmp.ne.s32.totalorder %s116, %s118
      %p125 = scmp.eq.s32.totalorder %s24, 1
      %p126 = por %p124, %p125
      %p127 = scmp.ne.s32.totalorder %s118, %s119
      %p128 = scmp.eq.s32.totalorder %s24, 0
      %p129 = por %p127, %p128
      %p130 = scmp.ne.s32.totalorder %s118, %s119
      %p131 = scmp.eq.s32.totalorder %s25, 1
      %p132 = por %p130, %p131
      %p134 = scmp.ne.s32.totalorder %s119, %s133
      %p135 = scmp.eq.s32.totalorder %s25, 0
      %p136 = por %p134, %p135
      %s137 = ssub.s32 %s19, %s26
      %p138 = scmp.eq.s32.totalorder %s137, 0
      %s140 = sadd.s32 %s139, 1
      %s141 = scalar_select %p138, %s139, %s140
      %p144 = pneg %p138
      %p145 = scmp.eq.s32.totalorder %s19, 1
      %p146 = por %p144, %p145
      %p147 = scmp.ne.s32.totalorder %s139, %s142
      %p148 = scmp.eq.s32.totalorder %s19, 0
      %p149 = por %p147, %p148
      %p150 = scmp.ne.s32.totalorder %s139, %s142
      %p151 = scmp.eq.s32.totalorder %s24, 1
      %p152 = por %p150, %p151
      %p153 = scmp.ne.s32.totalorder %s142, %s143
      %p154 = scmp.eq.s32.totalorder %s24, 0
      %p155 = por %p153, %p154
      %p156 = scmp.ne.s32.totalorder %s142, %s143
      %p157 = scmp.eq.s32.totalorder %s25, 1
      %p158 = por %p156, %p157
      %p160 = scmp.ne.s32.totalorder %s143, %s159
      %p161 = scmp.eq.s32.totalorder %s25, 0
      %p162 = por %p160, %p161
      %p163 = scmp.le.s32.totalorder 1, %s19
      %p164 = scmp.lt.s32.totalorder %s19, 3
      %p165 = pnand %p163, %p164
      %p166 = pneg %p165
      // Predicated region
      $region9: #{tpu_custom_call.1} parent=5 // pred_check
        _
      $region10: #{tpu_custom_call.1} parent=5 // pred_check_branch
        %168 = sbr.rel (%p165) target = $region12
      $region11: #{tpu_custom_call.1} parent=5 // pred_region
        %s169 = ssub.s32 %s19, 1
        // Predicated region
        $region13: #{tpu_custom_call.1} parent=11 // pred_check
          %p170 = pneg %p66
        $region14: #{tpu_custom_call.1} parent=11 // pred_check_branch
          %172 = sbr.rel (%p170) target = $region16
        $region15: #{tpu_custom_call.1} parent=11 // pred_region
          %s174 = ssub.s32 2048, 2048
          %175 = vsyncadd [#allocation8], %s174
          %s176 = sshll.u32 [#allocation7], 4
          %s177 = int_to_ptr.vmem [resolvable:$true] %s176
          %182 = dma.hbm_to_vmem [thread:$0]  %s1, 2048, %s177, [#allocation8], 128, 128, 8
        $region16: #{tpu_custom_call.1} parent=11 // pred_fallthru
          _
        // Predicated region
        $region17: #{tpu_custom_call.1} parent=11 // pred_check
          %p183 = pneg %p87
        $region18: #{tpu_custom_call.1} parent=11 // pred_check_branch
          %185 = sbr.rel (%p183) target = $region20
        $region19: #{tpu_custom_call.1} parent=11 // pred_region
          %s187 = ssub.s32 2048, 2048
          %188 = vsyncadd [#allocation8], %s187
          %s189 = sshll.u32 [#allocation9], 4
          %s190 = int_to_ptr.vmem [resolvable:$true] %s189
          %195 = dma.hbm_to_vmem [thread:$0]  %s2, 2048, %s190, [#allocation8], 128, 128, 8
        $region20: #{tpu_custom_call.1} parent=11 // pred_fallthru
          _
        // Predicated region
        $region21: #{tpu_custom_call.1} parent=11 // pred_check
          %p196 = pneg %p108
        $region22: #{tpu_custom_call.1} parent=11 // pred_check_branch
          %198 = sbr.rel (%p196) target = $region24
        $region23: #{tpu_custom_call.1} parent=11 // pred_region
          %s200 = ssub.s32 2048, 2048
          %201 = vsyncadd [#allocation11], %s200
          %s202 = sshll.u32 [#allocation10], 4
          %s203 = int_to_ptr.vmem [resolvable:$true] %s202
          %208 = dma.hbm_to_vmem [thread:$0]  %s3, 2048, %s203, [#allocation11], 128, 128, 8
        $region24: #{tpu_custom_call.1} parent=11 // pred_fallthru
          _
        // Predicated region
        $region25: #{tpu_custom_call.1} parent=11 // pred_check
          %p209 = pneg %p129
        $region26: #{tpu_custom_call.1} parent=11 // pred_check_branch
          %211 = sbr.rel (%p209) target = $region28
        $region27: #{tpu_custom_call.1} parent=11 // pred_region
          _
        $region28: #{tpu_custom_call.1} parent=11 // pred_fallthru
          _
      $region12: #{tpu_custom_call.1} parent=5 // pred_fallthru
        _
      %p212 = scmp.lt.s32.totalorder %s19, 2
      // Predicated region
      $region29: #{tpu_custom_call.1} parent=5 // pred_check
        %p213 = pneg %p212
      $region30: #{tpu_custom_call.1} parent=5 // pred_check_branch
        %215 = sbr.rel (%p213) target = $region32
      $region31: #{tpu_custom_call.1} parent=5 // pred_region
        // Predicated region
        $region33: #{tpu_custom_call.1} parent=31 // pred_check
          %p216 = pneg %p39
        $region34: #{tpu_custom_call.1} parent=31 // pred_check_branch
          %218 = sbr.rel (%p216) target = $region36
        $region35: #{tpu_custom_call.1} parent=31 // pred_region
          %s219 = sand.u32 %s29, 1
          %s220 = scalar_lea.sflag [#allocation5], %s219
          %s221 = sand.u32 %s29, 1
          %s222 = smul.addr %s221, 32
          %s223 = scalar_lea.vmem [#allocation4], %s222
          %s224 = smul.u32 4, %s19
          %s226 = ssub.s32 512, 512
          %227 = vsyncadd %s220, %s226
          %s228 = smul.addr %s224, 128
          %s229 = scalar_lea.hbm %s0, %s228
          %s230 = sshll.u32 %s223, 4
          %s231 = int_to_ptr.vmem [resolvable:$true] %s230
          %236 = dma.hbm_to_vmem [thread:$0]  %s229, 512, %s231, %s220, 128, 128, 8
        $region36: #{tpu_custom_call.1} parent=31 // pred_fallthru
          _
      $region32: #{tpu_custom_call.1} parent=5 // pred_fallthru
        _
      %p237 = scmp.le.s32.totalorder 1, %s19
      %p238 = scmp.lt.s32.totalorder %s19, 3
      %p239 = pnand %p237, %p238
      %p240 = pneg %p239
      // Predicated region
      $region37: #{tpu_custom_call.1} parent=5 // pred_check
        _
      $region38: #{tpu_custom_call.1} parent=5 // pred_check_branch
        %242 = sbr.rel (%p239) target = $region40
      $region39: #{tpu_custom_call.1} parent=5 // pred_region
        %s243 = ssub.s32 %s19, 1
        %s244 = sand.u32 %s32, 1
        %s245 = scalar_lea.sflag [#allocation5], %s244
        %s246 = sand.u32 %s32, 1
        %s247 = smul.addr %s246, 32
        %s248 = scalar_lea.vmem [#allocation4], %s247
        // Predicated region
        $region41: #{tpu_custom_call.1} parent=39 // pred_check
          %p249 = pneg %p45
        $region42: #{tpu_custom_call.1} parent=39 // pred_check_branch
          %251 = sbr.rel (%p249) target = $region44
        $region43: #{tpu_custom_call.1} parent=39 // pred_region
          %252 = dma.done %s245, 512
        $region44: #{tpu_custom_call.1} parent=39 // pred_fallthru
          _
        // Predicated region
        $region45: #{tpu_custom_call.1} parent=39 // pred_check
          %p253 = pneg %p66
        $region46: #{tpu_custom_call.1} parent=39 // pred_check_branch
          %255 = sbr.rel (%p253) target = $region48
        $region47: #{tpu_custom_call.1} parent=39 // pred_region
          %256 = dma.done [#allocation8], 2048
        $region48: #{tpu_custom_call.1} parent=39 // pred_fallthru
          _
        // Predicated region
        $region49: #{tpu_custom_call.1} parent=39 // pred_check
          %p257 = pneg %p87
        $region50: #{tpu_custom_call.1} parent=39 // pred_check_branch
          %259 = sbr.rel (%p257) target = $region52
        $region51: #{tpu_custom_call.1} parent=39 // pred_region
          %260 = dma.done [#allocation8], 2048
        $region52: #{tpu_custom_call.1} parent=39 // pred_fallthru
          _
        // Predicated region
        $region53: #{tpu_custom_call.1} parent=39 // pred_check
          %p261 = pneg %p108
        $region54: #{tpu_custom_call.1} parent=39 // pred_check_branch
          %263 = sbr.rel (%p261) target = $region56
        $region55: #{tpu_custom_call.1} parent=39 // pred_region
          %264 = dma.done [#allocation11], 2048
        $region56: #{tpu_custom_call.1} parent=39 // pred_fallthru
          _
        %s265 = sand.u32 %s32, 1
        %s266 = scalar_lea.sflag [#allocation5], %s265
        %s267 = sand.u32 %s32, 1
        %s268 = smul.addr %s267, 32
        %s269 = scalar_lea.vmem [#allocation4], %s268
        %p270 = pneg %p45
        %p271 = pneg %p42
        %p272 = pneg %p66
        %p273 = pneg %p63
        %p274 = pneg %p87
        %p275 = pneg %p84
        %p276 = pneg %p108
        %p277 = pneg %p105
        %p278 = pneg %p129
        %p279 = pneg %p126
        %p280 = pneg %p155
        %p281 = pneg %p152
        %s282 = sand.u32 %s142, 1
        %s283 = scalar_lea.sflag [#allocation6], %s282
        %s284 = sand.u32 %s142, 1
        %s285 = smul.addr %s284, 32
        %s286 = scalar_lea.vmem [#allocation12], %s285
        %s287 = smul.u32 4, %s24
        %s288 = smul.u32 4, %s24
        %p289 = scmp.eq.s32.totalorder %s24, 0
        // Predicated region
        $region57: #{tpu_custom_call.1} parent=39 // pred_check
          %p290 = pneg %p289
        $region58: #{tpu_custom_call.1} parent=39 // pred_check_branch
          %292 = sbr.rel (%p290) target = $region60
        $region59: #{tpu_custom_call.1} parent=39 // pred_region
          %293 = vst [vmem:[#allocation3] sm:$0xff] 0.0
        $region60: #{tpu_custom_call.1} parent=39 // pred_fallthru
          _
        %v294 = vld [vmem:[%s248] sm:$0xff]
        %v295 = vld [vmem:[%s248 + $0x8] sm:$0xff]
        %v296 = vld [vmem:[%s248 + $0x10] sm:$0xff]
        %v297 = vld [vmem:[%s248 + $0x18] sm:$0xff]
        %v298 = vld [vmem:[#allocation7] sm:$0xff]
        %v299 = vld [vmem:[#allocation7 + $0x8] sm:$0xff]
        %v300 = vld [vmem:[#allocation7 + $0x10] sm:$0xff]
        %v301 = vld [vmem:[#allocation7 + $0x18] sm:$0xff]
        %v302 = vld [vmem:[#allocation7 + $0x20] sm:$0xff]
        %v303 = vld [vmem:[#allocation7 + $0x28] sm:$0xff]
        %v304 = vld [vmem:[#allocation7 + $0x30] sm:$0xff]
        %v305 = vld [vmem:[#allocation7 + $0x38] sm:$0xff]
        %v306 = vld [vmem:[#allocation7 + $0x40] sm:$0xff]
        %v307 = vld [vmem:[#allocation7 + $0x48] sm:$0xff]
        %v308 = vld [vmem:[#allocation7 + $0x50] sm:$0xff]
        %v309 = vld [vmem:[#allocation7 + $0x58] sm:$0xff]
        %v310 = vld [vmem:[#allocation7 + $0x60] sm:$0xff]
        %v311 = vld [vmem:[#allocation7 + $0x68] sm:$0xff]
        %v312 = vld [vmem:[#allocation7 + $0x70] sm:$0xff]
        %v313 = vld [vmem:[#allocation7 + $0x78] sm:$0xff]
        %314 = vmatprep.subr.mxu0 0.0
        %315 = vmatpush1.msra.mxu0 %v298
        %316 = vmatprep.subr.mxu0 0.0
        %317 = vmatpush1.msra.mxu0 %v299
        %318 = vmatprep.subr.mxu0 0.0
        %319 = vmatpush1.msra.mxu0 %v300
        %320 = vmatprep.subr.mxu0 0.0
        %321 = vmatpush1.msra.mxu0 %v301
        %322 = vmatprep.subr.mxu0 0.0
        %323 = vmatpush1.msra.mxu0 %v302
        %324 = vmatprep.subr.mxu0 0.0
        %325 = vmatpush1.msra.mxu0 %v303
        %326 = vmatprep.subr.mxu0 0.0
        %327 = vmatpush1.msra.mxu0 %v304
        %328 = vmatprep.subr.mxu0 0.0
        %329 = vmatpush1.msra.mxu0 %v305
        %330 = vmatprep.subr.mxu0 0.0
        %331 = vmatpush1.msra.mxu0 %v306
        %332 = vmatprep.subr.mxu0 0.0
        %333 = vmatpush1.msra.mxu0 %v307
        %334 = vmatprep.subr.mxu0 0.0
        %335 = vmatpush1.msra.mxu0 %v308
        %336 = vmatprep.subr.mxu0 0.0
        %337 = vmatpush1.msra.mxu0 %v309
        %338 = vmatprep.subr.mxu0 0.0
        %339 = vmatpush1.msra.mxu0 %v310
        %340 = vmatprep.subr.mxu0 0.0
        %341 = vmatpush1.msra.mxu0 %v311
        %342 = vmatprep.subr.mxu0 0.0
        %343 = vmatpush1.msra.mxu0 %v312
        %344 = vmatprep.subr.mxu0 0.0
        %345 = vmatpush1.msra.mxu0 %v313
        %346 = vmatprep.subr.mxu0 0.0
        %347 = vmatpush1.msra.mxu0 0.0
        %348 = vmatprep.subr.mxu0 0.0
        %349 = vmatpush1.msra.mxu0 0.0
        %350 = vmatprep.subr.mxu0 0.0
        %351 = vmatpush1.msra.mxu0 0.0
        %352 = vmatprep.subr.mxu0 0.0
        %353 = vmatpush1.msra.mxu0 0.0
        %354 = vmatprep.subr.mxu0 0.0
        %355 = vmatpush1.msra.mxu0 0.0
        %356 = vmatprep.subr.mxu0 0.0
        %357 = vmatpush1.msra.mxu0 0.0
        %358 = vmatprep.subr.mxu0 0.0
        %359 = vmatpush1.msra.mxu0 0.0
        %360 = vmatprep.subr.mxu0 0.0
        %361 = vmatpush1.msra.mxu0 0.0
        %362 = vmatprep.subr.mxu0 0.0
        %363 = vmatpush1.msra.mxu0 0.0
        %364 = vmatprep.subr.mxu0 0.0
        %365 = vmatpush1.msra.mxu0 0.0
        %366 = vmatprep.subr.mxu0 0.0
        %367 = vmatpush1.msra.mxu0 0.0
        %368 = vmatprep.subr.mxu0 0.0
        %369 = vmatpush1.msra.mxu0 0.0
        %370 = vmatprep.subr.mxu0 0.0
        %371 = vmatpush1.msra.mxu0 0.0
        %372 = vmatprep.subr.mxu0 0.0
        %373 = vmatpush1.msra.mxu0 0.0
        %374 = vmatprep.subr.mxu0 0.0
        %375 = vmatpush1.msra.mxu0 0.0
        %376 = vmatprep.subr.mxu0 0.0
        %377 = vmatpush1.msra.mxu0 0.0
        %378 = vmatprep.mubr.f32.mxu0 0.0
        %379 = vmatmul.mubr.f32.gmra.mrb[0].mxu0 %v294
        %v380 = vpop.f32.mrb[0].mxu0
        %v381 = vadd.f32 0.0, %v380
        %v382 = vpop.f32.mrb[0].mxu0
        %383 = vmatprep.mubr.f32.mxu0 0.0
        %384 = vmatmul.mubr.f32.gmra.mrb[0].mxu0 %v295
        %v385 = vpop.f32.mrb[0].mxu0
        %v386 = vadd.f32 0.0, %v385
        %v387 = vpop.f32.mrb[0].mxu0
        %388 = vmatprep.mubr.f32.mxu0 0.0
        %389 = vmatmul.mubr.f32.gmra.mrb[0].mxu0 %v296
        %v390 = vpop.f32.mrb[0].mxu0
        %v391 = vadd.f32 0.0, %v390
        %v392 = vpop.f32.mrb[0].mxu0
        %393 = vmatprep.mubr.f32.mxu0 0.0
        %394 = vmatmul.mubr.f32.gmra.mrb[0].mxu0 %v297
        %v395 = vpop.f32.mrb[0].mxu0
        %v396 = vadd.f32 0.0, %v395
        %v397 = vpop.f32.mrb[0].mxu0
        %398 = vdwg.mxu0
        %399 = vst [vmem:[#allocation2] sm:$0xff] %v381
        %400 = vst [vmem:[#allocation2 + $0x8] sm:$0xff] %v386
        %401 = vst [vmem:[#allocation2 + $0x10] sm:$0xff] %v391
        %402 = vst [vmem:[#allocation2 + $0x18] sm:$0xff] %v396
        %v403 = vld [vmem:[#allocation9] sm:$0xff]
        %v404 = vld [vmem:[#allocation9 + $0x8] sm:$0xff]
        %v405 = vld [vmem:[#allocation9 + $0x10] sm:$0xff]
        %v406 = vld [vmem:[#allocation9 + $0x18] sm:$0xff]
        %v407 = vld [vmem:[#allocation9 + $0x20] sm:$0xff]
        %v408 = vld [vmem:[#allocation9 + $0x28] sm:$0xff]
        %v409 = vld [vmem:[#allocation9 + $0x30] sm:$0xff]
        %v410 = vld [vmem:[#allocation9 + $0x38] sm:$0xff]
        %v411 = vld [vmem:[#allocation9 + $0x40] sm:$0xff]
        %v412 = vld [vmem:[#allocation9 + $0x48] sm:$0xff]
        %v413 = vld [vmem:[#allocation9 + $0x50] sm:$0xff]
        %v414 = vld [vmem:[#allocation9 + $0x58] sm:$0xff]
        %v415 = vld [vmem:[#allocation9 + $0x60] sm:$0xff]
        %v416 = vld [vmem:[#allocation9 + $0x68] sm:$0xff]
        %v417 = vld [vmem:[#allocation9 + $0x70] sm:$0xff]
        %v418 = vld [vmem:[#allocation9 + $0x78] sm:$0xff]
        %v419 = vld [vmem:[#allocation10] sm:$0xff]
        %v420 = vld [vmem:[#allocation10 + $0x8] sm:$0xff]
        %v421 = vld [vmem:[#allocation10 + $0x10] sm:$0xff]
        %v422 = vld [vmem:[#allocation10 + $0x18] sm:$0xff]
        %v423 = vld [vmem:[#allocation10 + $0x20] sm:$0xff]
        %v424 = vld [vmem:[#allocation10 + $0x28] sm:$0xff]
        %v425 = vld [vmem:[#allocation10 + $0x30] sm:$0xff]
        %v426 = vld [vmem:[#allocation10 + $0x38] sm:$0xff]
        %v427 = vld [vmem:[#allocation10 + $0x40] sm:$0xff]
        %v428 = vld [vmem:[#allocation10 + $0x48] sm:$0xff]
        %v429 = vld [vmem:[#allocation10 + $0x50] sm:$0xff]
        %v430 = vld [vmem:[#allocation10 + $0x58] sm:$0xff]
        %v431 = vld [vmem:[#allocation10 + $0x60] sm:$0xff]
        %v432 = vld [vmem:[#allocation10 + $0x68] sm:$0xff]
        %v433 = vld [vmem:[#allocation10 + $0x70] sm:$0xff]
        %v434 = vld [vmem:[#allocation10 + $0x78] sm:$0xff]
        %v435 = vld [vmem:[%s4] sm:$0x1]
        %v436 = vld [vmem:[#allocation3] sm:$0xff]
        %v437 = vld [vmem:[#allocation2] sm:$0xff]
        %438 = vmatprep.subr.mxu0 0.0
        %439 = vmatpush1.msra.mxu0 %v403
        %440 = vmatprep.subr.mxu0 0.0
        %441 = vmatpush1.msra.mxu0 %v404
        %442 = vmatprep.subr.mxu0 0.0
        %443 = vmatpush1.msra.mxu0 %v405
        %444 = vmatprep.subr.mxu0 0.0
        %445 = vmatpush1.msra.mxu0 %v406
        %446 = vmatprep.subr.mxu0 0.0
        %447 = vmatpush1.msra.mxu0 %v407
        %448 = vmatprep.subr.mxu0 0.0
        %449 = vmatpush1.msra.mxu0 %v408
        %450 = vmatprep.subr.mxu0 0.0
        %451 = vmatpush1.msra.mxu0 %v409
        %452 = vmatprep.subr.mxu0 0.0
        %453 = vmatpush1.msra.mxu0 %v410
        %454 = vmatprep.subr.mxu0 0.0
        %455 = vmatpush1.msra.mxu0 %v411
        %456 = vmatprep.subr.mxu0 0.0
        %457 = vmatpush1.msra.mxu0 %v412
        %458 = vmatprep.subr.mxu0 0.0
        %459 = vmatpush1.msra.mxu0 %v413
        %460 = vmatprep.subr.mxu0 0.0
        %461 = vmatpush1.msra.mxu0 %v414
        %462 = vmatprep.subr.mxu0 0.0
        %463 = vmatpush1.msra.mxu0 %v415
        %464 = vmatprep.subr.mxu0 0.0
        %465 = vmatpush1.msra.mxu0 %v416
        %466 = vmatprep.subr.mxu0 0.0
        %467 = vmatpush1.msra.mxu0 %v417
        %468 = vmatprep.subr.mxu0 0.0
        %469 = vmatpush1.msra.mxu0 %v418
        %470 = vmatprep.subr.mxu0 0.0
        %471 = vmatpush1.msra.mxu0 0.0
        %472 = vmatprep.subr.mxu0 0.0
        %473 = vmatpush1.msra.mxu0 0.0
        %474 = vmatprep.subr.mxu0 0.0
        %475 = vmatpush1.msra.mxu0 0.0
        %476 = vmatprep.subr.mxu0 0.0
        %477 = vmatpush1.msra.mxu0 0.0
        %478 = vmatprep.subr.mxu0 0.0
        %479 = vmatpush1.msra.mxu0 0.0
        %480 = vmatprep.subr.mxu0 0.0
        %481 = vmatpush1.msra.mxu0 0.0
        %482 = vmatprep.subr.mxu0 0.0
        %483 = vmatpush1.msra.mxu0 0.0
        %484 = vmatprep.subr.mxu0 0.0
        %485 = vmatpush1.msra.mxu0 0.0
        %486 = vmatprep.subr.mxu0 0.0
        %487 = vmatpush1.msra.mxu0 0.0
        %488 = vmatprep.subr.mxu0 0.0
        %489 = vmatpush1.msra.mxu0 0.0
        %490 = vmatprep.subr.mxu0 0.0
        %491 = vmatpush1.msra.mxu0 0.0
        %492 = vmatprep.subr.mxu0 0.0
        %493 = vmatpush1.msra.mxu0 0.0
        %494 = vmatprep.subr.mxu0 0.0
        %495 = vmatpush1.msra.mxu0 0.0
        %496 = vmatprep.subr.mxu0 0.0
        %497 = vmatpush1.msra.mxu0 0.0
        %498 = vmatprep.subr.mxu0 0.0
        %499 = vmatpush1.msra.mxu0 0.0
        %500 = vmatprep.subr.mxu0 0.0
        %501 = vmatpush1.msra.mxu0 0.0
        %502 = vmatprep.mubr.f32.mxu0 0.0
        %503 = vmatmul.mubr.f32.gmra.mrb[0].mxu0 %v436
        %v504 = vpop.f32.mrb[0].mxu0
        %v505 = vadd.f32 0.0, %v504
        %v506 = vpop.f32.mrb[0].mxu0
        %507 = vdwg.mxu0
        %v508 = vadd.f32 %v437, %v505
        %v509 = vtanh.pop %v508
        %v511 = vlaneseq
        %v512 = vshrl.u32 %v511, 7
        %v513 = vsub.s32 0, %v512
        %v514 = vrot.slane %v435, %v513
        %516 = vmatprep.subr.mxu0 0.0
        %517 = vmatpush1.msra.mxu0 %v419
        %518 = vmatprep.subr.mxu0 0.0
        %519 = vmatpush1.msra.mxu0 %v420
        %520 = vmatprep.subr.mxu0 0.0
        %521 = vmatpush1.msra.mxu0 %v421
        %522 = vmatprep.subr.mxu0 0.0
        %523 = vmatpush1.msra.mxu0 %v422
        %524 = vmatprep.subr.mxu0 0.0
        %525 = vmatpush1.msra.mxu0 %v423
        %526 = vmatprep.subr.mxu0 0.0
        %527 = vmatpush1.msra.mxu0 %v424
        %528 = vmatprep.subr.mxu0 0.0
        %529 = vmatpush1.msra.mxu0 %v425
        %530 = vmatprep.subr.mxu0 0.0
        %531 = vmatpush1.msra.mxu0 %v426
        %532 = vmatprep.subr.mxu0 0.0
        %533 = vmatpush1.msra.mxu0 %v427
        %534 = vmatprep.subr.mxu0 0.0
        %535 = vmatpush1.msra.mxu0 %v428
        %536 = vmatprep.subr.mxu0 0.0
        %537 = vmatpush1.msra.mxu0 %v429
        %538 = vmatprep.subr.mxu0 0.0
        %539 = vmatpush1.msra.mxu0 %v430
        %540 = vmatprep.subr.mxu0 0.0
        %541 = vmatpush1.msra.mxu0 %v431
        %542 = vmatprep.subr.mxu0 0.0
        %543 = vmatpush1.msra.mxu0 %v432
        %544 = vmatprep.subr.mxu0 0.0
        %545 = vmatpush1.msra.mxu0 %v433
        %546 = vmatprep.subr.mxu0 0.0
        %547 = vmatpush1.msra.mxu0 %v434
        %548 = vmatprep.subr.mxu0 0.0
        %549 = vmatpush1.msra.mxu0 0.0
        %550 = vmatprep.subr.mxu0 0.0
        %551 = vmatpush1.msra.mxu0 0.0
        %552 = vmatprep.subr.mxu0 0.0
        %553 = vmatpush1.msra.mxu0 0.0
        %554 = vmatprep.subr.mxu0 0.0
        %555 = vmatpush1.msra.mxu0 0.0
        %556 = vmatprep.subr.mxu0 0.0
        %557 = vmatpush1.msra.mxu0 0.0
        %558 = vmatprep.subr.mxu0 0.0
        %559 = vmatpush1.msra.mxu0 0.0
        %560 = vmatprep.subr.mxu0 0.0
        %561 = vmatpush1.msra.mxu0 0.0
        %562 = vmatprep.subr.mxu0 0.0
        %563 = vmatpush1.msra.mxu0 0.0
        %564 = vmatprep.subr.mxu0 0.0
        %565 = vmatpush1.msra.mxu0 0.0
        %566 = vmatprep.subr.mxu0 0.0
        %567 = vmatpush1.msra.mxu0 0.0
        %568 = vmatprep.subr.mxu0 0.0
        %569 = vmatpush1.msra.mxu0 0.0
        %570 = vmatprep.subr.mxu0 0.0
        %571 = vmatpush1.msra.mxu0 0.0
        %572 = vmatprep.subr.mxu0 0.0
        %573 = vmatpush1.msra.mxu0 0.0
        %574 = vmatprep.subr.mxu0 0.0
        %575 = vmatpush1.msra.mxu0 0.0
        %576 = vmatprep.subr.mxu0 0.0
        %577 = vmatpush1.msra.mxu0 0.0
        %578 = vmatprep.subr.mxu0 0.0
        %579 = vmatpush1.msra.mxu0 0.0
        %580 = vmatprep.mubr.f32.mxu0 0.0
        %581 = vmatmul.mubr.f32.gmra.mrb[0].mxu0 %v509
        %v582 = vpop.f32.mrb[0].mxu0
        %v583 = vadd.f32 %v514, %v582
        %v584 = vpop.f32.mrb[0].mxu0
        %585 = vdwg.mxu0
        %586 = vst [vmem:[%s286] sm:$0xff] %v583
        %s587 = scalar_lea.vmem [#allocation2], 8
        %v588 = vld [vmem:[%s587] sm:$0xff]
        %589 = vmatprep.subr.mxu0 0.0
        %590 = vmatpush1.msra.mxu0 %v403
        %591 = vmatprep.subr.mxu0 0.0
        %592 = vmatpush1.msra.mxu0 %v404
        %593 = vmatprep.subr.mxu0 0.0
        %594 = vmatpush1.msra.mxu0 %v405
        %595 = vmatprep.subr.mxu0 0.0
        %596 = vmatpush1.msra.mxu0 %v406
        %597 = vmatprep.subr.mxu0 0.0
        %598 = vmatpush1.msra.mxu0 %v407
        %599 = vmatprep.subr.mxu0 0.0
        %600 = vmatpush1.msra.mxu0 %v408
        %601 = vmatprep.subr.mxu0 0.0
        %602 = vmatpush1.msra.mxu0 %v409
        %603 = vmatprep.subr.mxu0 0.0
        %604 = vmatpush1.msra.mxu0 %v410
        %605 = vmatprep.subr.mxu0 0.0
        %606 = vmatpush1.msra.mxu0 %v411
        %607 = vmatprep.subr.mxu0 0.0
        %608 = vmatpush1.msra.mxu0 %v412
        %609 = vmatprep.subr.mxu0 0.0
        %610 = vmatpush1.msra.mxu0 %v413
        %611 = vmatprep.subr.mxu0 0.0
        %612 = vmatpush1.msra.mxu0 %v414
        %613 = vmatprep.subr.mxu0 0.0
        %614 = vmatpush1.msra.mxu0 %v415
        %615 = vmatprep.subr.mxu0 0.0
        %616 = vmatpush1.msra.mxu0 %v416
        %617 = vmatprep.subr.mxu0 0.0
        %618 = vmatpush1.msra.mxu0 %v417
        %619 = vmatprep.subr.mxu0 0.0
        %620 = vmatpush1.msra.mxu0 %v418
        %621 = vmatprep.subr.mxu0 0.0
        %622 = vmatpush1.msra.mxu0 0.0
        %623 = vmatprep.subr.mxu0 0.0
        %624 = vmatpush1.msra.mxu0 0.0
        %625 = vmatprep.subr.mxu0 0.0
        %626 = vmatpush1.msra.mxu0 0.0
        %627 = vmatprep.subr.mxu0 0.0
        %628 = vmatpush1.msra.mxu0 0.0
        %629 = vmatprep.subr.mxu0 0.0
        %630 = vmatpush1.msra.mxu0 0.0
        %631 = vmatprep.subr.mxu0 0.0
        %632 = vmatpush1.msra.mxu0 0.0
        %633 = vmatprep.subr.mxu0 0.0
        %634 = vmatpush1.msra.mxu0 0.0
        %635 = vmatprep.subr.mxu0 0.0
        %636 = vmatpush1.msra.mxu0 0.0
        %637 = vmatprep.subr.mxu0 0.0
        %638 = vmatpush1.msra.mxu0 0.0
        %639 = vmatprep.subr.mxu0 0.0
        %640 = vmatpush1.msra.mxu0 0.0
        %641 = vmatprep.subr.mxu0 0.0
        %642 = vmatpush1.msra.mxu0 0.0
        %643 = vmatprep.subr.mxu0 0.0
        %644 = vmatpush1.msra.mxu0 0.0
        %645 = vmatprep.subr.mxu0 0.0
        %646 = vmatpush1.msra.mxu0 0.0
        %647 = vmatprep.subr.mxu0 0.0
        %648 = vmatpush1.msra.mxu0 0.0
        %649 = vmatprep.subr.mxu0 0.0
        %650 = vmatpush1.msra.mxu0 0.0
        %651 = vmatprep.subr.mxu0 0.0
        %652 = vmatpush1.msra.mxu0 0.0
        %653 = vmatprep.mubr.f32.mxu0 0.0
        %654 = vmatmul.mubr.f32.gmra.mrb[0].mxu0 %v509
        %v655 = vpop.f32.mrb[0].mxu0
        %v656 = vadd.f32 0.0, %v655
        %v657 = vpop.f32.mrb[0].mxu0
        %658 = vdwg.mxu0
        %v659 = vadd.f32 %v588, %v656
        %v660 = vtanh.pop %v659
        %661 = vmatprep.subr.mxu0 0.0
        %662 = vmatpush1.msra.mxu0 %v419
        %663 = vmatprep.subr.mxu0 0.0
        %664 = vmatpush1.msra.mxu0 %v420
        %665 = vmatprep.subr.mxu0 0.0
        %666 = vmatpush1.msra.mxu0 %v421
        %667 = vmatprep.subr.mxu0 0.0
        %668 = vmatpush1.msra.mxu0 %v422
        %669 = vmatprep.subr.mxu0 0.0
        %670 = vmatpush1.msra.mxu0 %v423
        %671 = vmatprep.subr.mxu0 0.0
        %672 = vmatpush1.msra.mxu0 %v424
        %673 = vmatprep.subr.mxu0 0.0
        %674 = vmatpush1.msra.mxu0 %v425
        %675 = vmatprep.subr.mxu0 0.0
        %676 = vmatpush1.msra.mxu0 %v426
        %677 = vmatprep.subr.mxu0 0.0
        %678 = vmatpush1.msra.mxu0 %v427
        %679 = vmatprep.subr.mxu0 0.0
        %680 = vmatpush1.msra.mxu0 %v428
        %681 = vmatprep.subr.mxu0 0.0
        %682 = vmatpush1.msra.mxu0 %v429
        %683 = vmatprep.subr.mxu0 0.0
        %684 = vmatpush1.msra.mxu0 %v430
        %685 = vmatprep.subr.mxu0 0.0
        %686 = vmatpush1.msra.mxu0 %v431
        %687 = vmatprep.subr.mxu0 0.0
        %688 = vmatpush1.msra.mxu0 %v432
        %689 = vmatprep.subr.mxu0 0.0
        %690 = vmatpush1.msra.mxu0 %v433
        %691 = vmatprep.subr.mxu0 0.0
        %692 = vmatpush1.msra.mxu0 %v434
        %693 = vmatprep.subr.mxu0 0.0
        %694 = vmatpush1.msra.mxu0 0.0
        %695 = vmatprep.subr.mxu0 0.0
        %696 = vmatpush1.msra.mxu0 0.0
        %697 = vmatprep.subr.mxu0 0.0
        %698 = vmatpush1.msra.mxu0 0.0
        %699 = vmatprep.subr.mxu0 0.0
        %700 = vmatpush1.msra.mxu0 0.0
        %701 = vmatprep.subr.mxu0 0.0
        %702 = vmatpush1.msra.mxu0 0.0
        %703 = vmatprep.subr.mxu0 0.0
        %704 = vmatpush1.msra.mxu0 0.0
        %705 = vmatprep.subr.mxu0 0.0
        %706 = vmatpush1.msra.mxu0 0.0
        %707 = vmatprep.subr.mxu0 0.0
        %708 = vmatpush1.msra.mxu0 0.0
        %709 = vmatprep.subr.mxu0 0.0
        %710 = vmatpush1.msra.mxu0 0.0
        %711 = vmatprep.subr.mxu0 0.0
        %712 = vmatpush1.msra.mxu0 0.0
        %713 = vmatprep.subr.mxu0 0.0
        %714 = vmatpush1.msra.mxu0 0.0
        %715 = vmatprep.subr.mxu0 0.0
        %716 = vmatpush1.msra.mxu0 0.0
        %717 = vmatprep.subr.mxu0 0.0
        %718 = vmatpush1.msra.mxu0 0.0
        %719 = vmatprep.subr.mxu0 0.0
        %720 = vmatpush1.msra.mxu0 0.0
        %721 = vmatprep.subr.mxu0 0.0
        %722 = vmatpush1.msra.mxu0 0.0
        %723 = vmatprep.subr.mxu0 0.0
        %724 = vmatpush1.msra.mxu0 0.0
        %725 = vmatprep.mubr.f32.mxu0 0.0
        %726 = vmatmul.mubr.f32.gmra.mrb[0].mxu0 %v660
        %v727 = vpop.f32.mrb[0].mxu0
        %v728 = vadd.f32 %v514, %v727
        %v729 = vpop.f32.mrb[0].mxu0
        %730 = vdwg.mxu0
        %s731 = scalar_lea.vmem %s286, 8 [#allocation12]
        %732 = vst [vmem:[%s731] sm:$0xff] %v728
        %s733 = scalar_lea.vmem [#allocation2], 16
        %v734 = vld [vmem:[%s733] sm:$0xff]
        %735 = vmatprep.subr.mxu0 0.0
        %736 = vmatpush1.msra.mxu0 %v403
        %737 = vmatprep.subr.mxu0 0.0
        %738 = vmatpush1.msra.mxu0 %v404
        %739 = vmatprep.subr.mxu0 0.0
        %740 = vmatpush1.msra.mxu0 %v405
        %741 = vmatprep.subr.mxu0 0.0
        %742 = vmatpush1.msra.mxu0 %v406
        %743 = vmatprep.subr.mxu0 0.0
        %744 = vmatpush1.msra.mxu0 %v407
        %745 = vmatprep.subr.mxu0 0.0
        %746 = vmatpush1.msra.mxu0 %v408
        %747 = vmatprep.subr.mxu0 0.0
        %748 = vmatpush1.msra.mxu0 %v409
        %749 = vmatprep.subr.mxu0 0.0
        %750 = vmatpush1.msra.mxu0 %v410
        %751 = vmatprep.subr.mxu0 0.0
        %752 = vmatpush1.msra.mxu0 %v411
        %753 = vmatprep.subr.mxu0 0.0
        %754 = vmatpush1.msra.mxu0 %v412
        %755 = vmatprep.subr.mxu0 0.0
        %756 = vmatpush1.msra.mxu0 %v413
        %757 = vmatprep.subr.mxu0 0.0
        %758 = vmatpush1.msra.mxu0 %v414
        %759 = vmatprep.subr.mxu0 0.0
        %760 = vmatpush1.msra.mxu0 %v415
        %761 = vmatprep.subr.mxu0 0.0
        %762 = vmatpush1.msra.mxu0 %v416
        %763 = vmatprep.subr.mxu0 0.0
        %764 = vmatpush1.msra.mxu0 %v417
        %765 = vmatprep.subr.mxu0 0.0
        %766 = vmatpush1.msra.mxu0 %v418
        %767 = vmatprep.subr.mxu0 0.0
        %768 = vmatpush1.msra.mxu0 0.0
        %769 = vmatprep.subr.mxu0 0.0
        %770 = vmatpush1.msra.mxu0 0.0
        %771 = vmatprep.subr.mxu0 0.0
        %772 = vmatpush1.msra.mxu0 0.0
        %773 = vmatprep.subr.mxu0 0.0
        %774 = vmatpush1.msra.mxu0 0.0
        %775 = vmatprep.subr.mxu0 0.0
        %776 = vmatpush1.msra.mxu0 0.0
        %777 = vmatprep.subr.mxu0 0.0
        %778 = vmatpush1.msra.mxu0 0.0
        %779 = vmatprep.subr.mxu0 0.0
        %780 = vmatpush1.msra.mxu0 0.0
        %781 = vmatprep.subr.mxu0 0.0
        %782 = vmatpush1.msra.mxu0 0.0
        %783 = vmatprep.subr.mxu0 0.0
        %784 = vmatpush1.msra.mxu0 0.0
        %785 = vmatprep.subr.mxu0 0.0
        %786 = vmatpush1.msra.mxu0 0.0
        %787 = vmatprep.subr.mxu0 0.0
        %788 = vmatpush1.msra.mxu0 0.0
        %789 = vmatprep.subr.mxu0 0.0
        %790 = vmatpush1.msra.mxu0 0.0
        %791 = vmatprep.subr.mxu0 0.0
        %792 = vmatpush1.msra.mxu0 0.0
        %793 = vmatprep.subr.mxu0 0.0
        %794 = vmatpush1.msra.mxu0 0.0
        %795 = vmatprep.subr.mxu0 0.0
        %796 = vmatpush1.msra.mxu0 0.0
        %797 = vmatprep.subr.mxu0 0.0
        %798 = vmatpush1.msra.mxu0 0.0
        %799 = vmatprep.mubr.f32.mxu0 0.0
        %800 = vmatmul.mubr.f32.gmra.mrb[0].mxu0 %v660
        %v801 = vpop.f32.mrb[0].mxu0
        %v802 = vadd.f32 0.0, %v801
        %v803 = vpop.f32.mrb[0].mxu0
        %804 = vdwg.mxu0
        %v805 = vadd.f32 %v734, %v802
        %v806 = vtanh.pop %v805
        %807 = vmatprep.subr.mxu0 0.0
        %808 = vmatpush1.msra.mxu0 %v419
        %809 = vmatprep.subr.mxu0 0.0
        %810 = vmatpush1.msra.mxu0 %v420
        %811 = vmatprep.subr.mxu0 0.0
        %812 = vmatpush1.msra.mxu0 %v421
        %813 = vmatprep.subr.mxu0 0.0
        %814 = vmatpush1.msra.mxu0 %v422
        %815 = vmatprep.subr.mxu0 0.0
        %816 = vmatpush1.msra.mxu0 %v423
        %817 = vmatprep.subr.mxu0 0.0
        %818 = vmatpush1.msra.mxu0 %v424
        %819 = vmatprep.subr.mxu0 0.0
        %820 = vmatpush1.msra.mxu0 %v425
        %821 = vmatprep.subr.mxu0 0.0
        %822 = vmatpush1.msra.mxu0 %v426
        %823 = vmatprep.subr.mxu0 0.0
        %824 = vmatpush1.msra.mxu0 %v427
        %825 = vmatprep.subr.mxu0 0.0
        %826 = vmatpush1.msra.mxu0 %v428
        %827 = vmatprep.subr.mxu0 0.0
        %828 = vmatpush1.msra.mxu0 %v429
        %829 = vmatprep.subr.mxu0 0.0
        %830 = vmatpush1.msra.mxu0 %v430
        %831 = vmatprep.subr.mxu0 0.0
        %832 = vmatpush1.msra.mxu0 %v431
        %833 = vmatprep.subr.mxu0 0.0
        %834 = vmatpush1.msra.mxu0 %v432
        %835 = vmatprep.subr.mxu0 0.0
        %836 = vmatpush1.msra.mxu0 %v433
        %837 = vmatprep.subr.mxu0 0.0
        %838 = vmatpush1.msra.mxu0 %v434
        %839 = vmatprep.subr.mxu0 0.0
        %840 = vmatpush1.msra.mxu0 0.0
        %841 = vmatprep.subr.mxu0 0.0
        %842 = vmatpush1.msra.mxu0 0.0
        %843 = vmatprep.subr.mxu0 0.0
        %844 = vmatpush1.msra.mxu0 0.0
        %845 = vmatprep.subr.mxu0 0.0
        %846 = vmatpush1.msra.mxu0 0.0
        %847 = vmatprep.subr.mxu0 0.0
        %848 = vmatpush1.msra.mxu0 0.0
        %849 = vmatprep.subr.mxu0 0.0
        %850 = vmatpush1.msra.mxu0 0.0
        %851 = vmatprep.subr.mxu0 0.0
        %852 = vmatpush1.msra.mxu0 0.0
        %853 = vmatprep.subr.mxu0 0.0
        %854 = vmatpush1.msra.mxu0 0.0
        %855 = vmatprep.subr.mxu0 0.0
        %856 = vmatpush1.msra.mxu0 0.0
        %857 = vmatprep.subr.mxu0 0.0
        %858 = vmatpush1.msra.mxu0 0.0
        %859 = vmatprep.subr.mxu0 0.0
        %860 = vmatpush1.msra.mxu0 0.0
        %861 = vmatprep.subr.mxu0 0.0
        %862 = vmatpush1.msra.mxu0 0.0
        %863 = vmatprep.subr.mxu0 0.0
        %864 = vmatpush1.msra.mxu0 0.0
        %865 = vmatprep.subr.mxu0 0.0
        %866 = vmatpush1.msra.mxu0 0.0
        %867 = vmatprep.subr.mxu0 0.0
        %868 = vmatpush1.msra.mxu0 0.0
        %869 = vmatprep.subr.mxu0 0.0
        %870 = vmatpush1.msra.mxu0 0.0
        %871 = vmatprep.mubr.f32.mxu0 0.0
        %872 = vmatmul.mubr.f32.gmra.mrb[0].mxu0 %v806
        %v873 = vpop.f32.mrb[0].mxu0
        %v874 = vadd.f32 %v514, %v873
        %v875 = vpop.f32.mrb[0].mxu0
        %876 = vdwg.mxu0
        %s877 = scalar_lea.vmem %s286, 16 [#allocation12]
        %878 = vst [vmem:[%s877] sm:$0xff] %v874
        %s879 = scalar_lea.vmem [#allocation2], 24
        %v880 = vld [vmem:[%s879] sm:$0xff]
        %881 = vmatprep.subr.mxu0 0.0
        %882 = vmatpush1.msra.mxu0 %v403
        %883 = vmatprep.subr.mxu0 0.0
        %884 = vmatpush1.msra.mxu0 %v404
        %885 = vmatprep.subr.mxu0 0.0
        %886 = vmatpush1.msra.mxu0 %v405
        %887 = vmatprep.subr.mxu0 0.0
        %888 = vmatpush1.msra.mxu0 %v406
        %889 = vmatprep.subr.mxu0 0.0
        %890 = vmatpush1.msra.mxu0 %v407
        %891 = vmatprep.subr.mxu0 0.0
        %892 = vmatpush1.msra.mxu0 %v408
        %893 = vmatprep.subr.mxu0 0.0
        %894 = vmatpush1.msra.mxu0 %v409
        %895 = vmatprep.subr.mxu0 0.0
        %896 = vmatpush1.msra.mxu0 %v410
        %897 = vmatprep.subr.mxu0 0.0
        %898 = vmatpush1.msra.mxu0 %v411
        %899 = vmatprep.subr.mxu0 0.0
        %900 = vmatpush1.msra.mxu0 %v412
        %901 = vmatprep.subr.mxu0 0.0
        %902 = vmatpush1.msra.mxu0 %v413
        %903 = vmatprep.subr.mxu0 0.0
        %904 = vmatpush1.msra.mxu0 %v414
        %905 = vmatprep.subr.mxu0 0.0
        %906 = vmatpush1.msra.mxu0 %v415
        %907 = vmatprep.subr.mxu0 0.0
        %908 = vmatpush1.msra.mxu0 %v416
        %909 = vmatprep.subr.mxu0 0.0
        %910 = vmatpush1.msra.mxu0 %v417
        %911 = vmatprep.subr.mxu0 0.0
        %912 = vmatpush1.msra.mxu0 %v418
        %913 = vmatprep.subr.mxu0 0.0
        %914 = vmatpush1.msra.mxu0 0.0
        %915 = vmatprep.subr.mxu0 0.0
        %916 = vmatpush1.msra.mxu0 0.0
        %917 = vmatprep.subr.mxu0 0.0
        %918 = vmatpush1.msra.mxu0 0.0
        %919 = vmatprep.subr.mxu0 0.0
        %920 = vmatpush1.msra.mxu0 0.0
        %921 = vmatprep.subr.mxu0 0.0
        %922 = vmatpush1.msra.mxu0 0.0
        %923 = vmatprep.subr.mxu0 0.0
        %924 = vmatpush1.msra.mxu0 0.0
        %925 = vmatprep.subr.mxu0 0.0
        %926 = vmatpush1.msra.mxu0 0.0
        %927 = vmatprep.subr.mxu0 0.0
        %928 = vmatpush1.msra.mxu0 0.0
        %929 = vmatprep.subr.mxu0 0.0
        %930 = vmatpush1.msra.mxu0 0.0
        %931 = vmatprep.subr.mxu0 0.0
        %932 = vmatpush1.msra.mxu0 0.0
        %933 = vmatprep.subr.mxu0 0.0
        %934 = vmatpush1.msra.mxu0 0.0
        %935 = vmatprep.subr.mxu0 0.0
        %936 = vmatpush1.msra.mxu0 0.0
        %937 = vmatprep.subr.mxu0 0.0
        %938 = vmatpush1.msra.mxu0 0.0
        %939 = vmatprep.subr.mxu0 0.0
        %940 = vmatpush1.msra.mxu0 0.0
        %941 = vmatprep.subr.mxu0 0.0
        %942 = vmatpush1.msra.mxu0 0.0
        %943 = vmatprep.subr.mxu0 0.0
        %944 = vmatpush1.msra.mxu0 0.0
        %945 = vmatprep.mubr.f32.mxu0 0.0
        %946 = vmatmul.mubr.f32.gmra.mrb[0].mxu0 %v806
        %v947 = vpop.f32.mrb[0].mxu0
        %v948 = vadd.f32 0.0, %v947
        %v949 = vpop.f32.mrb[0].mxu0
        %950 = vdwg.mxu0
        %v951 = vadd.f32 %v880, %v948
        %v952 = vtanh.pop %v951
        %953 = vmatprep.subr.mxu0 0.0
        %954 = vmatpush1.msra.mxu0 %v419
        %955 = vmatprep.subr.mxu0 0.0
        %956 = vmatpush1.msra.mxu0 %v420
        %957 = vmatprep.subr.mxu0 0.0
        %958 = vmatpush1.msra.mxu0 %v421
        %959 = vmatprep.subr.mxu0 0.0
        %960 = vmatpush1.msra.mxu0 %v422
        %961 = vmatprep.subr.mxu0 0.0
        %962 = vmatpush1.msra.mxu0 %v423
        %963 = vmatprep.subr.mxu0 0.0
        %964 = vmatpush1.msra.mxu0 %v424
        %965 = vmatprep.subr.mxu0 0.0
        %966 = vmatpush1.msra.mxu0 %v425
        %967 = vmatprep.subr.mxu0 0.0
        %968 = vmatpush1.msra.mxu0 %v426
        %969 = vmatprep.subr.mxu0 0.0
        %970 = vmatpush1.msra.mxu0 %v427
        %971 = vmatprep.subr.mxu0 0.0
        %972 = vmatpush1.msra.mxu0 %v428
        %973 = vmatprep.subr.mxu0 0.0
        %974 = vmatpush1.msra.mxu0 %v429
        %975 = vmatprep.subr.mxu0 0.0
        %976 = vmatpush1.msra.mxu0 %v430
        %977 = vmatprep.subr.mxu0 0.0
        %978 = vmatpush1.msra.mxu0 %v431
        %979 = vmatprep.subr.mxu0 0.0
        %980 = vmatpush1.msra.mxu0 %v432
        %981 = vmatprep.subr.mxu0 0.0
        %982 = vmatpush1.msra.mxu0 %v433
        %983 = vmatprep.subr.mxu0 0.0
        %984 = vmatpush1.msra.mxu0 %v434
        %985 = vmatprep.subr.mxu0 0.0
        %986 = vmatpush1.msra.mxu0 0.0
        %987 = vmatprep.subr.mxu0 0.0
        %988 = vmatpush1.msra.mxu0 0.0
        %989 = vmatprep.subr.mxu0 0.0
        %990 = vmatpush1.msra.mxu0 0.0
        %991 = vmatprep.subr.mxu0 0.0
        %992 = vmatpush1.msra.mxu0 0.0
        %993 = vmatprep.subr.mxu0 0.0
        %994 = vmatpush1.msra.mxu0 0.0
        %995 = vmatprep.subr.mxu0 0.0
        %996 = vmatpush1.msra.mxu0 0.0
        %997 = vmatprep.subr.mxu0 0.0
        %998 = vmatpush1.msra.mxu0 0.0
        %999 = vmatprep.subr.mxu0 0.0
        %1000 = vmatpush1.msra.mxu0 0.0
        %1001 = vmatprep.subr.mxu0 0.0
        %1002 = vmatpush1.msra.mxu0 0.0
        %1003 = vmatprep.subr.mxu0 0.0
        %1004 = vmatpush1.msra.mxu0 0.0
        %1005 = vmatprep.subr.mxu0 0.0
        %1006 = vmatpush1.msra.mxu0 0.0
        %1007 = vmatprep.subr.mxu0 0.0
        %1008 = vmatpush1.msra.mxu0 0.0
        %1009 = vmatprep.subr.mxu0 0.0
        %1010 = vmatpush1.msra.mxu0 0.0
        %1011 = vmatprep.subr.mxu0 0.0
        %1012 = vmatpush1.msra.mxu0 0.0
        %1013 = vmatprep.subr.mxu0 0.0
        %1014 = vmatpush1.msra.mxu0 0.0
        %1015 = vmatprep.subr.mxu0 0.0
        %1016 = vmatpush1.msra.mxu0 0.0
        %1017 = vmatprep.mubr.f32.mxu0 0.0
        %1018 = vmatmul.mubr.f32.gmra.mrb[0].mxu0 %v952
        %v1019 = vpop.f32.mrb[0].mxu0
        %v1020 = vadd.f32 %v514, %v1019
        %v1021 = vpop.f32.mrb[0].mxu0
        %1022 = vdwg.mxu0
        %s1023 = scalar_lea.vmem %s286, 24 [#allocation12]
        %1024 = vst [vmem:[%s1023] sm:$0xff] %v1020
        %1025 = vst [vmem:[#allocation3] sm:$0xff] %v952
        %s1026 = sand.u32 %s142, 1
        %s1027 = scalar_lea.sflag [#allocation6], %s1026
        %s1028 = sand.u32 %s142, 1
        %s1029 = smul.addr %s1028, 32
        %s1030 = scalar_lea.vmem [#allocation12], %s1029
        // Predicated region
        $region61: #{tpu_custom_call.1} parent=39 // pred_check
          %p1031 = pneg %p152
        $region62: #{tpu_custom_call.1} parent=39 // pred_check_branch
          %1033 = sbr.rel (%p1031) target = $region64
        $region63: #{tpu_custom_call.1} parent=39 // pred_region
          %s1034 = smul.u32 4, %s24
          %s1036 = ssub.s32 512, 512
          %1037 = vsyncadd %s1027, %s1036
          %s1038 = smul.addr %s1034, 128
          %s1039 = scalar_lea.hbm %s5, %s1038
          %s1040 = sshll.u32 %s1030, 4
          %s1041 = int_to_ptr.vmem [resolvable:$true] %s1040
          %1046 = dma.vmem_to_hbm [thread:$0]  %s1041, 512, %s1039, %s1027, 128, 128, 8
        $region64: #{tpu_custom_call.1} parent=39 // pred_fallthru
          _
      $region40: #{tpu_custom_call.1} parent=5 // pred_fallthru
        _
      %p1047 = scmp.le.s32.totalorder 2, %s19
      // Predicated region
      $region65: #{tpu_custom_call.1} parent=5 // pred_check
        %p1048 = pneg %p1047
      $region66: #{tpu_custom_call.1} parent=5 // pred_check_branch
        %1050 = sbr.rel (%p1048) target = $region68
      $region67: #{tpu_custom_call.1} parent=5 // pred_region
        %s1051 = ssub.s32 %s19, 2
        // Predicated region
        $region69: #{tpu_custom_call.1} parent=67 // pred_check
          %p1052 = pneg %p158
        $region70: #{tpu_custom_call.1} parent=67 // pred_check_branch
          %1054 = sbr.rel (%p1052) target = $region72
        $region71: #{tpu_custom_call.1} parent=67 // pred_region
          %s1055 = sand.u32 %s143, 1
          %s1056 = scalar_lea.sflag [#allocation6], %s1055
          %s1057 = sand.u32 %s143, 1
          %s1058 = smul.addr %s1057, 32
          %s1059 = scalar_lea.vmem [#allocation12], %s1058
          %1060 = dma.done %s1056, 512
        $region72: #{tpu_custom_call.1} parent=67 // pred_fallthru
          _
      $region68: #{tpu_custom_call.1} parent=5 // pred_fallthru
        _
    $region6: #{tpu_custom_call.1} parent=1 // loop_footer
      %s23 = sadd.s32 1, %s19
    $region7: #{tpu_custom_call.1} parent=1 // loop_footer_branch
      %18 = sbr.rel target = $region3
    $region8: #{tpu_custom_call.1} parent=1 // loop_exit
      _
    %1061 = vsyncpa [#allocation5], 1
    %s1062 = scalar_lea.sflag [#allocation5], 1
    %1063 = vsyncpa %s1062, 1
    %1064 = vsyncpa [#allocation8], 1
    %1065 = vsyncpa [#allocation11], 1
    %1066 = vsyncpa [#allocation6], 1
    %s1067 = scalar_lea.sflag [#allocation6], 1
    %1068 = vsyncpa %s1067, 1

</llo_original>
